<compile_context>
chip_gen: v6e
topology: v6e:2x2x1
jax: 0.10.0
libtpu: 0.0.40
codegen_flags: <defaults>
</compile_context>

<pallas_src>
import math

import jax
import jax.numpy as jnp
from jax.experimental import pallas as pl
from jax.experimental.pallas import tpu as pltpu


def _round_up(x, m):
    return ((x + m - 1) // m) * m


def _make_pooling_kernel(num_bins, beta, sample_points, n_valid, tn):
    mask_tail = (n_valid % tn) != 0  # trace masking code only if a ragged tile exists

    def kernel(data_ref, out_ref):
        # data_ref: (tn, tw)        lane-dense slab of folded (B*F) columns
        # out_ref:  (num_bins, tw)  resident output block (accumulated across n steps)
        n_idx = pl.program_id(1)

        d = data_ref[...]  # (tn, tw) f32
        if mask_tail:
            # Rows past the true instance count belong to an out-of-bounds block
            # region; replace them with a sentinel whose Gaussian underflows to 0.
            row = jax.lax.broadcasted_iota(jnp.int32, d.shape, 0)
            d = jnp.where(n_idx * tn + row < n_valid, d, 1e3)

        # Per-bin row sums built in registers; exp (EUP) stays the only saturated
        # unit, the cross-sublane sum rides the XLU slot.
        rows = []
        for sp_k in sample_points:
            diff = d - sp_k
            e = jnp.exp(beta * (diff * diff))                   # (tn, tw) f32
            rows.append(jnp.sum(e, axis=0, keepdims=True))      # (1, tw)
        partial = jnp.concatenate(rows, axis=0)                 # (num_bins, tw)

        @pl.when(n_idx == 0)
        def _init():
            out_ref[...] = jnp.zeros_like(out_ref)

        # ONE full-tile accumulate per grid step (no per-bin sub-tile RMWs).
        out_ref[...] += partial

        @pl.when(n_idx == pl.num_programs(1) - 1)
        def _finalize():
            acc = out_ref[...]                                  # (num_bins, tw)
            norm = jnp.sum(acc, axis=0, keepdims=True)          # (1, tw)
            out_ref[...] = acc / norm                           # exact divide (cheap)

    return kernel


def pooling_pallas(data, num_bins=21, sig=0.0167, *, max_block_bytes=None,
                   max_col_tile=1024):
    """data: (B, N, F) float32 -> (B, F, num_bins) float32."""
    data = jnp.asarray(data, jnp.float32)
    B, N, F = data.shape
    beta = -1.0 / (2.0 * float(sig) ** 2)
    if num_bins > 1:
        sample_points = tuple(float(k) / float(num_bins - 1) for k in range(num_bins))
    else:
        sample_points = (0.0,)

    # Fold (B, F) into a single lane-dense column axis W, padded to 128 lanes.
    W = B * F
    W_pad = _round_up(W, 128)
    folded = jnp.transpose(data, (1, 0, 2)).reshape(N, W)       # layout plumbing only
    if W_pad != W:
        folded = jnp.pad(folded, ((0, 0), (0, W_pad - W)))      # zero cols, sliced off later

    # Generation-aware VMEM budget (v7x: 64 MiB physical VMEM vs 128 MiB on v5e/v6e).
    try:
        vmem_cap = int(getattr(pltpu.get_tpu_info(), "vmem_capacity_bytes",
                               64 * 1024 * 1024))
    except Exception:  # conservative fallback
        vmem_cap = 64 * 1024 * 1024
    vmem_limit = int(min(max(vmem_cap // 2, 16 * 1024 * 1024), 64 * 1024 * 1024))
    if max_block_bytes is None:
        # Headroom for the double-buffered input block plus elementwise temporaries.
        max_block_bytes = min(8 * 1024 * 1024, vmem_limit // 6)

    # Column tile: largest multiple of 128 that divides W_pad and fits the cap.
    m = W_pad // 128
    max_cols = max(1, min(m, max_col_tile // 128))
    cols = max(d for d in range(1, max_cols + 1) if m % d == 0)
    tw = cols * 128

    # Instance (reduction) tile: multiple of 8 sublanes, sized to the block budget.
    tn_cap = max(8, (max_block_bytes // (tw * 4)) // 8 * 8)
    tn = int(min(_round_up(N, 8), tn_cap))
    n_row_tiles = pl.cdiv(N, tn)
    n_col_tiles = W_pad // tw

    kernel = _make_pooling_kernel(num_bins, beta, sample_points, N, tn)

    out_kw = pl.pallas_call(
        kernel,
        out_shape=jax.ShapeDtypeStruct((num_bins, W_pad), jnp.float32),
        grid=(n_col_tiles, n_row_tiles),     # column tiles parallel, N reduction last
        in_specs=[pl.BlockSpec((tn, tw), lambda w, n: (n, w))],
        out_specs=pl.BlockSpec((num_bins, tw), lambda w, n: (0, w)),
        compiler_params=pltpu.CompilerParams(
            dimension_semantics=("parallel", "arbitrary"),
            vmem_limit_bytes=vmem_limit,
        ),
    )(folded)

    # Un-fold: (num_bins, W_pad) -> (B, F, num_bins).
    out = out_kw[:, :W].reshape(num_bins, B, F)
    return jnp.transpose(out, (1, 2, 0))


def pooling_reference(data, num_bins=21, sig=0.0167):
    """Plain-JAX reference mirroring the PyTorch forward (keeps alfa)."""
    data = jnp.asarray(data, jnp.float32)
    alfa = 1.0 / math.sqrt(2.0 * math.pi * sig ** 2)
    beta = -1.0 / (2.0 * sig ** 2)
    sp = jnp.linspace(0.0, 1.0, num_bins, dtype=jnp.float32)
    diff = sp[None, None, None, :] - data[..., None]        # (B, N, F, K)
    result = alfa * jnp.exp(beta * diff ** 2)
    unnorm = jnp.sum(result, axis=1)                        # (B, F, K)
    norm = jnp.sum(unnorm, axis=2, keepdims=True)           # (B, F, 1)
    return unnorm / norm


if __name__ == "__main__":
    num_bins, sig = 21, 0.0167

    # Small shape consistent with the module (num_features=28): batch=2, instances=8.
    B, N, F = 2, 8, 28
    data = jax.random.uniform(jax.random.PRNGKey(0), (B, N, F), dtype=jnp.float32)

    out = jax.block_until_ready(pooling_pallas(data, num_bins=num_bins, sig=sig))
    ref = pooling_reference(data, num_bins=num_bins, sig=sig)
    assert out.shape == (B, F, num_bins)
    assert jnp.allclose(out, ref, atol=1e-5, rtol=1e-5), "mismatch vs reference"

    # Second check: force multi-step instance tiling with a ragged last tile through
    # the same kernel (tiny block cap -> tn=8, N=20 -> 3 reduction steps, 4 masked rows).
    B2, N2, F2 = 2, 20, 28
    data2 = jax.random.uniform(jax.random.PRNGKey(1), (B2, N2, F2), dtype=jnp.float32)
    out2 = jax.block_until_ready(
        pooling_pallas(data2, num_bins=num_bins, sig=sig, max_block_bytes=8 * 128 * 4))
    ref2 = pooling_reference(data2, num_bins=num_bins, sig=sig)
    assert jnp.allclose(out2, ref2, atol=1e-5, rtol=1e-5), "mismatch vs reference (tiled)"

    print("KERNEL_OK")
</pallas_src>

<mosaic_0001>
module attributes {stable_mosaic.version = 11 : i64} {
  func.func @kernel(%arg0: i32, %arg1: i32, %arg2: memref<8x128xf32, #tpu.memory_space<vmem>>, %arg3: memref<21x128xf32, #tpu.memory_space<vmem>>) attributes {dimension_semantics = [#tpu.dimension_semantics<parallel>, #tpu.dimension_semantics<arbitrary>], iteration_bounds = array<i64: 1, 1>, scalar_prefetch = 0 : i64, scratch_operands = 0 : i64, tpu.core_type = #tpu.core_type<tc>, window_params = [{transform_indices = @transform_0, window_bounds = array<i64: 8, 128>}, {transform_indices = @transform_1, window_bounds = array<i64: 21, 128>}]} {
    %c0 = arith.constant 0 : index
    %c0_0 = arith.constant 0 : index
    %0 = vector.load %arg2[%c0, %c0_0] : memref<8x128xf32, #tpu.memory_space<vmem>>, vector<8x128xf32>
    %cst = arith.constant 0.000000e+00 : f32
    %1 = vector.broadcast %cst : f32 to vector<8x128xf32>
    %2 = arith.subf %0, %1 : vector<8x128xf32>
    %3 = arith.mulf %2, %2 : vector<8x128xf32>
    %cst_1 = arith.constant -1792.82153 : f32
    %4 = vector.broadcast %cst_1 : f32 to vector<8x128xf32>
    %5 = arith.mulf %4, %3 : vector<8x128xf32>
    %6 = math.exp %5 : vector<8x128xf32>
    %cst_2 = arith.constant dense<0.000000e+00> : vector<128xf32>
    %7 = vector.multi_reduction <add>, %6, %cst_2 [0] : vector<8x128xf32> to vector<128xf32>
    %8 = vector.shape_cast %7 : vector<128xf32> to vector<1x128xf32>
    %cst_3 = arith.constant 5.000000e-02 : f32
    %9 = vector.broadcast %cst_3 : f32 to vector<8x128xf32>
    %10 = arith.subf %0, %9 : vector<8x128xf32>
    %11 = arith.mulf %10, %10 : vector<8x128xf32>
    %cst_4 = arith.constant -1792.82153 : f32
    %12 = vector.broadcast %cst_4 : f32 to vector<8x128xf32>
    %13 = arith.mulf %12, %11 : vector<8x128xf32>
    %14 = math.exp %13 : vector<8x128xf32>
    %cst_5 = arith.constant dense<0.000000e+00> : vector<128xf32>
    %15 = vector.multi_reduction <add>, %14, %cst_5 [0] : vector<8x128xf32> to vector<128xf32>
    %16 = vector.shape_cast %15 : vector<128xf32> to vector<1x128xf32>
    %cst_6 = arith.constant 1.000000e-01 : f32
    %17 = vector.broadcast %cst_6 : f32 to vector<8x128xf32>
    %18 = arith.subf %0, %17 : vector<8x128xf32>
    %19 = arith.mulf %18, %18 : vector<8x128xf32>
    %cst_7 = arith.constant -1792.82153 : f32
    %20 = vector.broadcast %cst_7 : f32 to vector<8x128xf32>
    %21 = arith.mulf %20, %19 : vector<8x128xf32>
    %22 = math.exp %21 : vector<8x128xf32>
    %cst_8 = arith.constant dense<0.000000e+00> : vector<128xf32>
    %23 = vector.multi_reduction <add>, %22, %cst_8 [0] : vector<8x128xf32> to vector<128xf32>
    %24 = vector.shape_cast %23 : vector<128xf32> to vector<1x128xf32>
    %cst_9 = arith.constant 1.500000e-01 : f32
    %25 = vector.broadcast %cst_9 : f32 to vector<8x128xf32>
    %26 = arith.subf %0, %25 : vector<8x128xf32>
    %27 = arith.mulf %26, %26 : vector<8x128xf32>
    %cst_10 = arith.constant -1792.82153 : f32
    %28 = vector.broadcast %cst_10 : f32 to vector<8x128xf32>
    %29 = arith.mulf %28, %27 : vector<8x128xf32>
    %30 = math.exp %29 : vector<8x128xf32>
    %cst_11 = arith.constant dense<0.000000e+00> : vector<128xf32>
    %31 = vector.multi_reduction <add>, %30, %cst_11 [0] : vector<8x128xf32> to vector<128xf32>
    %32 = vector.shape_cast %31 : vector<128xf32> to vector<1x128xf32>
    %cst_12 = arith.constant 2.000000e-01 : f32
    %33 = vector.broadcast %cst_12 : f32 to vector<8x128xf32>
    %34 = arith.subf %0, %33 : vector<8x128xf32>
    %35 = arith.mulf %34, %34 : vector<8x128xf32>
    %cst_13 = arith.constant -1792.82153 : f32
    %36 = vector.broadcast %cst_13 : f32 to vector<8x128xf32>
    %37 = arith.mulf %36, %35 : vector<8x128xf32>
    %38 = math.exp %37 : vector<8x128xf32>
    %cst_14 = arith.constant dense<0.000000e+00> : vector<128xf32>
    %39 = vector.multi_reduction <add>, %38, %cst_14 [0] : vector<8x128xf32> to vector<128xf32>
    %40 = vector.shape_cast %39 : vector<128xf32> to vector<1x128xf32>
    %cst_15 = arith.constant 2.500000e-01 : f32
    %41 = vector.broadcast %cst_15 : f32 to vector<8x128xf32>
    %42 = arith.subf %0, %41 : vector<8x128xf32>
    %43 = arith.mulf %42, %42 : vector<8x128xf32>
    %cst_16 = arith.constant -1792.82153 : f32
    %44 = vector.broadcast %cst_16 : f32 to vector<8x128xf32>
    %45 = arith.mulf %44, %43 : vector<8x128xf32>
    %46 = math.exp %45 : vector<8x128xf32>
    %cst_17 = arith.constant dense<0.000000e+00> : vector<128xf32>
    %47 = vector.multi_reduction <add>, %46, %cst_17 [0] : vector<8x128xf32> to vector<128xf32>
    %48 = vector.shape_cast %47 : vector<128xf32> to vector<1x128xf32>
    %cst_18 = arith.constant 3.000000e-01 : f32
    %49 = vector.broadcast %cst_18 : f32 to vector<8x128xf32>
    %50 = arith.subf %0, %49 : vector<8x128xf32>
    %51 = arith.mulf %50, %50 : vector<8x128xf32>
    %cst_19 = arith.constant -1792.82153 : f32
    %52 = vector.broadcast %cst_19 : f32 to vector<8x128xf32>
    %53 = arith.mulf %52, %51 : vector<8x128xf32>
    %54 = math.exp %53 : vector<8x128xf32>
    %cst_20 = arith.constant dense<0.000000e+00> : vector<128xf32>
    %55 = vector.multi_reduction <add>, %54, %cst_20 [0] : vector<8x128xf32> to vector<128xf32>
    %56 = vector.shape_cast %55 : vector<128xf32> to vector<1x128xf32>
    %cst_21 = arith.constant 3.500000e-01 : f32
    %57 = vector.broadcast %cst_21 : f32 to vector<8x128xf32>
    %58 = arith.subf %0, %57 : vector<8x128xf32>
    %59 = arith.mulf %58, %58 : vector<8x128xf32>
    %cst_22 = arith.constant -1792.82153 : f32
    %60 = vector.broadcast %cst_22 : f32 to vector<8x128xf32>
    %61 = arith.mulf %60, %59 : vector<8x128xf32>
    %62 = math.exp %61 : vector<8x128xf32>
    %cst_23 = arith.constant dense<0.000000e+00> : vector<128xf32>
    %63 = vector.multi_reduction <add>, %62, %cst_23 [0] : vector<8x128xf32> to vector<128xf32>
    %64 = vector.shape_cast %63 : vector<128xf32> to vector<1x128xf32>
    %cst_24 = arith.constant 4.000000e-01 : f32
    %65 = vector.broadcast %cst_24 : f32 to vector<8x128xf32>
    %66 = arith.subf %0, %65 : vector<8x128xf32>
    %67 = arith.mulf %66, %66 : vector<8x128xf32>
    %cst_25 = arith.constant -1792.82153 : f32
    %68 = vector.broadcast %cst_25 : f32 to vector<8x128xf32>
    %69 = arith.mulf %68, %67 : vector<8x128xf32>
    %70 = math.exp %69 : vector<8x128xf32>
    %cst_26 = arith.constant dense<0.000000e+00> : vector<128xf32>
    %71 = vector.multi_reduction <add>, %70, %cst_26 [0] : vector<8x128xf32> to vector<128xf32>
    %72 = vector.shape_cast %71 : vector<128xf32> to vector<1x128xf32>
    %cst_27 = arith.constant 4.500000e-01 : f32
    %73 = vector.broadcast %cst_27 : f32 to vector<8x128xf32>
    %74 = arith.subf %0, %73 : vector<8x128xf32>
    %75 = arith.mulf %74, %74 : vector<8x128xf32>
    %cst_28 = arith.constant -1792.82153 : f32
    %76 = vector.broadcast %cst_28 : f32 to vector<8x128xf32>
    %77 = arith.mulf %76, %75 : vector<8x128xf32>
    %78 = math.exp %77 : vector<8x128xf32>
    %cst_29 = arith.constant dense<0.000000e+00> : vector<128xf32>
    %79 = vector.multi_reduction <add>, %78, %cst_29 [0] : vector<8x128xf32> to vector<128xf32>
    %80 = vector.shape_cast %79 : vector<128xf32> to vector<1x128xf32>
    %cst_30 = arith.constant 5.000000e-01 : f32
    %81 = vector.broadcast %cst_30 : f32 to vector<8x128xf32>
    %82 = arith.subf %0, %81 : vector<8x128xf32>
    %83 = arith.mulf %82, %82 : vector<8x128xf32>
    %cst_31 = arith.constant -1792.82153 : f32
    %84 = vector.broadcast %cst_31 : f32 to vector<8x128xf32>
    %85 = arith.mulf %84, %83 : vector<8x128xf32>
    %86 = math.exp %85 : vector<8x128xf32>
    %cst_32 = arith.constant dense<0.000000e+00> : vector<128xf32>
    %87 = vector.multi_reduction <add>, %86, %cst_32 [0] : vector<8x128xf32> to vector<128xf32>
    %88 = vector.shape_cast %87 : vector<128xf32> to vector<1x128xf32>
    %cst_33 = arith.constant 5.500000e-01 : f32
    %89 = vector.broadcast %cst_33 : f32 to vector<8x128xf32>
    %90 = arith.subf %0, %89 : vector<8x128xf32>
    %91 = arith.mulf %90, %90 : vector<8x128xf32>
    %cst_34 = arith.constant -1792.82153 : f32
    %92 = vector.broadcast %cst_34 : f32 to vector<8x128xf32>
    %93 = arith.mulf %92, %91 : vector<8x128xf32>
    %94 = math.exp %93 : vector<8x128xf32>
    %cst_35 = arith.constant dense<0.000000e+00> : vector<128xf32>
    %95 = vector.multi_reduction <add>, %94, %cst_35 [0] : vector<8x128xf32> to vector<128xf32>
    %96 = vector.shape_cast %95 : vector<128xf32> to vector<1x128xf32>
    %cst_36 = arith.constant 6.000000e-01 : f32
    %97 = vector.broadcast %cst_36 : f32 to vector<8x128xf32>
    %98 = arith.subf %0, %97 : vector<8x128xf32>
    %99 = arith.mulf %98, %98 : vector<8x128xf32>
    %cst_37 = arith.constant -1792.82153 : f32
    %100 = vector.broadcast %cst_37 : f32 to vector<8x128xf32>
    %101 = arith.mulf %100, %99 : vector<8x128xf32>
    %102 = math.exp %101 : vector<8x128xf32>
    %cst_38 = arith.constant dense<0.000000e+00> : vector<128xf32>
    %103 = vector.multi_reduction <add>, %102, %cst_38 [0] : vector<8x128xf32> to vector<128xf32>
    %104 = vector.shape_cast %103 : vector<128xf32> to vector<1x128xf32>
    %cst_39 = arith.constant 6.500000e-01 : f32
    %105 = vector.broadcast %cst_39 : f32 to vector<8x128xf32>
    %106 = arith.subf %0, %105 : vector<8x128xf32>
    %107 = arith.mulf %106, %106 : vector<8x128xf32>
    %cst_40 = arith.constant -1792.82153 : f32
    %108 = vector.broadcast %cst_40 : f32 to vector<8x128xf32>
    %109 = arith.mulf %108, %107 : vector<8x128xf32>
    %110 = math.exp %109 : vector<8x128xf32>
    %cst_41 = arith.constant dense<0.000000e+00> : vector<128xf32>
    %111 = vector.multi_reduction <add>, %110, %cst_41 [0] : vector<8x128xf32> to vector<128xf32>
    %112 = vector.shape_cast %111 : vector<128xf32> to vector<1x128xf32>
    %cst_42 = arith.constant 0.699999988 : f32
    %113 = vector.broadcast %cst_42 : f32 to vector<8x128xf32>
    %114 = arith.subf %0, %113 : vector<8x128xf32>
    %115 = arith.mulf %114, %114 : vector<8x128xf32>
    %cst_43 = arith.constant -1792.82153 : f32
    %116 = vector.broadcast %cst_43 : f32 to vector<8x128xf32>
    %117 = arith.mulf %116, %115 : vector<8x128xf32>
    %118 = math.exp %117 : vector<8x128xf32>
    %cst_44 = arith.constant dense<0.000000e+00> : vector<128xf32>
    %119 = vector.multi_reduction <add>, %118, %cst_44 [0] : vector<8x128xf32> to vector<128xf32>
    %120 = vector.shape_cast %119 : vector<128xf32> to vector<1x128xf32>
    %cst_45 = arith.constant 7.500000e-01 : f32
    %121 = vector.broadcast %cst_45 : f32 to vector<8x128xf32>
    %122 = arith.subf %0, %121 : vector<8x128xf32>
    %123 = arith.mulf %122, %122 : vector<8x128xf32>
    %cst_46 = arith.constant -1792.82153 : f32
    %124 = vector.broadcast %cst_46 : f32 to vector<8x128xf32>
    %125 = arith.mulf %124, %123 : vector<8x128xf32>
    %126 = math.exp %125 : vector<8x128xf32>
    %cst_47 = arith.constant dense<0.000000e+00> : vector<128xf32>
    %127 = vector.multi_reduction <add>, %126, %cst_47 [0] : vector<8x128xf32> to vector<128xf32>
    %128 = vector.shape_cast %127 : vector<128xf32> to vector<1x128xf32>
    %cst_48 = arith.constant 8.000000e-01 : f32
    %129 = vector.broadcast %cst_48 : f32 to vector<8x128xf32>
    %130 = arith.subf %0, %129 : vector<8x128xf32>
    %131 = arith.mulf %130, %130 : vector<8x128xf32>
    %cst_49 = arith.constant -1792.82153 : f32
    %132 = vector.broadcast %cst_49 : f32 to vector<8x128xf32>
    %133 = arith.mulf %132, %131 : vector<8x128xf32>
    %134 = math.exp %133 : vector<8x128xf32>
    %cst_50 = arith.constant dense<0.000000e+00> : vector<128xf32>
    %135 = vector.multi_reduction <add>, %134, %cst_50 [0] : vector<8x128xf32> to vector<128xf32>
    %136 = vector.shape_cast %135 : vector<128xf32> to vector<1x128xf32>
    %cst_51 = arith.constant 8.500000e-01 : f32
    %137 = vector.broadcast %cst_51 : f32 to vector<8x128xf32>
    %138 = arith.subf %0, %137 : vector<8x128xf32>
    %139 = arith.mulf %138, %138 : vector<8x128xf32>
    %cst_52 = arith.constant -1792.82153 : f32
    %140 = vector.broadcast %cst_52 : f32 to vector<8x128xf32>
    %141 = arith.mulf %140, %139 : vector<8x128xf32>
    %142 = math.exp %141 : vector<8x128xf32>
    %cst_53 = arith.constant dense<0.000000e+00> : vector<128xf32>
    %143 = vector.multi_reduction <add>, %142, %cst_53 [0] : vector<8x128xf32> to vector<128xf32>
    %144 = vector.shape_cast %143 : vector<128xf32> to vector<1x128xf32>
    %cst_54 = arith.constant 0.899999976 : f32
    %145 = vector.broadcast %cst_54 : f32 to vector<8x128xf32>
    %146 = arith.subf %0, %145 : vector<8x128xf32>
    %147 = arith.mulf %146, %146 : vector<8x128xf32>
    %cst_55 = arith.constant -1792.82153 : f32
    %148 = vector.broadcast %cst_55 : f32 to vector<8x128xf32>
    %149 = arith.mulf %148, %147 : vector<8x128xf32>
    %150 = math.exp %149 : vector<8x128xf32>
    %cst_56 = arith.constant dense<0.000000e+00> : vector<128xf32>
    %151 = vector.multi_reduction <add>, %150, %cst_56 [0] : vector<8x128xf32> to vector<128xf32>
    %152 = vector.shape_cast %151 : vector<128xf32> to vector<1x128xf32>
    %cst_57 = arith.constant 0.949999988 : f32
    %153 = vector.broadcast %cst_57 : f32 to vector<8x128xf32>
    %154 = arith.subf %0, %153 : vector<8x128xf32>
    %155 = arith.mulf %154, %154 : vector<8x128xf32>
    %cst_58 = arith.constant -1792.82153 : f32
    %156 = vector.broadcast %cst_58 : f32 to vector<8x128xf32>
    %157 = arith.mulf %156, %155 : vector<8x128xf32>
    %158 = math.exp %157 : vector<8x128xf32>
    %cst_59 = arith.constant dense<0.000000e+00> : vector<128xf32>
    %159 = vector.multi_reduction <add>, %158, %cst_59 [0] : vector<8x128xf32> to vector<128xf32>
    %160 = vector.shape_cast %159 : vector<128xf32> to vector<1x128xf32>
    %cst_60 = arith.constant 1.000000e+00 : f32
    %161 = vector.broadcast %cst_60 : f32 to vector<8x128xf32>
    %162 = arith.subf %0, %161 : vector<8x128xf32>
    %163 = arith.mulf %162, %162 : vector<8x128xf32>
    %cst_61 = arith.constant -1792.82153 : f32
    %164 = vector.broadcast %cst_61 : f32 to vector<8x128xf32>
    %165 = arith.mulf %164, %163 : vector<8x128xf32>
    %166 = math.exp %165 : vector<8x128xf32>
    %cst_62 = arith.constant dense<0.000000e+00> : vector<128xf32>
    %167 = vector.multi_reduction <add>, %166, %cst_62 [0] : vector<8x128xf32> to vector<128xf32>
    %168 = vector.shape_cast %167 : vector<128xf32> to vector<1x128xf32>
    %169 = tpu.concatenate %8, %16, %24, %32, %40, %48, %56, %64, %72, %80, %88, %96, %104, %112, %120, %128 in 0 : vector<1x128xf32>, vector<1x128xf32>, vector<1x128xf32>, vector<1x128xf32>, vector<1x128xf32>, vector<1x128xf32>, vector<1x128xf32>, vector<1x128xf32>, vector<1x128xf32>, vector<1x128xf32>, vector<1x128xf32>, vector<1x128xf32>, vector<1x128xf32>, vector<1x128xf32>, vector<1x128xf32>, vector<1x128xf32> -> vector<16x128xf32>
    %170 = tpu.concatenate %136, %144, %152, %160, %168 in 0 : vector<1x128xf32>, vector<1x128xf32>, vector<1x128xf32>, vector<1x128xf32>, vector<1x128xf32> -> vector<5x128xf32>
    %171 = tpu.concatenate %169, %170 in 0 : vector<16x128xf32>, vector<5x128xf32> -> vector<21x128xf32>
    %c0_i32 = arith.constant 0 : i32
    %172 = arith.cmpi eq, %arg1, %c0_i32 : i32
    %173 = arith.extui %172 : i1 to i32
    %c0_i32_63 = arith.constant 0 : i32
    %174 = arith.cmpi ne, %173, %c0_i32_63 : i32
    scf.if %174 {
      %cst_70 = arith.constant 0.000000e+00 : f32
      %181 = vector.broadcast %cst_70 : f32 to vector<21x128xf32>
      %c0_71 = arith.constant 0 : index
      %c0_72 = arith.constant 0 : index
      %182 = vector.load %arg3[%c0_71, %c0_72] : memref<21x128xf32, #tpu.memory_space<vmem>>, vector<21x128xf32>
      tpu.vector_store %arg3[%c0_71, %c0_72], %181 {strides = array<i32>} : memref<21x128xf32, #tpu.memory_space<vmem>>, vector<21x128xf32>,
    } else {
    }
    %c0_64 = arith.constant 0 : index
    %c0_65 = arith.constant 0 : index
    %175 = vector.load %arg3[%c0_64, %c0_65] : memref<21x128xf32, #tpu.memory_space<vmem>>, vector<21x128xf32>
    %176 = arith.addf %175, %171 : vector<21x128xf32>
    %c0_66 = arith.constant 0 : index
    %c0_67 = arith.constant 0 : index
    %177 = vector.load %arg3[%c0_66, %c0_67] : memref<21x128xf32, #tpu.memory_space<vmem>>, vector<21x128xf32>
    tpu.vector_store %arg3[%c0_66, %c0_67], %176 {strides = array<i32>} : memref<21x128xf32, #tpu.memory_space<vmem>>, vector<21x128xf32>,
    %c0_i32_68 = arith.constant 0 : i32
    %178 = arith.cmpi eq, %arg1, %c0_i32_68 : i32
    %179 = arith.extui %178 : i1 to i32
    %c0_i32_69 = arith.constant 0 : i32
    %180 = arith.cmpi ne, %179, %c0_i32_69 : i32
    scf.if %180 {
      %c0_70 = arith.constant 0 : index
      %c0_71 = arith.constant 0 : index
      %181 = vector.load %arg3[%c0_70, %c0_71] : memref<21x128xf32, #tpu.memory_space<vmem>>, vector<21x128xf32>
      %cst_72 = arith.constant dense<0.000000e+00> : vector<128xf32>
      %182 = vector.multi_reduction <add>, %181, %cst_72 [0] : vector<21x128xf32> to vector<128xf32>
      %183 = vector.shape_cast %182 : vector<128xf32> to vector<1x128xf32>
      %184 = vector.broadcast %183 : vector<1x128xf32> to vector<21x128xf32>
      %185 = arith.divf %181, %184 : vector<21x128xf32>
      %c0_73 = arith.constant 0 : index
      %c0_74 = arith.constant 0 : index
      %186 = vector.load %arg3[%c0_73, %c0_74] : memref<21x128xf32, #tpu.memory_space<vmem>>, vector<21x128xf32>
      tpu.vector_store %arg3[%c0_73, %c0_74], %185 {strides = array<i32>} : memref<21x128xf32, #tpu.memory_space<vmem>>, vector<21x128xf32>,
    } else {
    }
    return
  }
  func.func @transform_0(%arg0: i32, %arg1: i32) -> (i32, i32) {
    %c0_i32 = arith.constant 0 : i32
    return %arg1, %arg0 : i32, i32
  }
  func.func @transform_1(%arg0: i32, %arg1: i32) -> (i32, i32) {
    %c0_i32 = arith.constant 0 : i32
    %c0_i32_0 = arith.constant 0 : i32
    return %c0_i32, %arg0 : i32, i32
  }
}

</mosaic_0001>

<llo_original>
// kernel: tpu_custom_call.1
$region0: #{tpu_custom_call.1}
  #allocation0 [shape = 'u32[]', space=smem, size = 0x4, offset = 0x4, fixed_abs, tag = 'smem constant byte address 0x4 - core index']
  #allocation1 [shape = 'u32[144,128]{1,0:T(1,128)}', space=vmem, size = 0x12000, scoped, tag = 'internal scratch']
  %s0 = inlined_call_operand.hbm [shape: f32[8,128], index: 0, kind: input, shape index: {}]
  %s1 = inlined_call_operand.hbm [shape: f32[21,128], index: 1, kind: output, shape index: {}]
  %s2 = sld [smem:[#allocation0]]
  $region26: #{tpu_custom_call.1} parent=0
    _
  %s4 = ssub.s32 1, %s2
  %s5 = scalar_select 0, %s4, %s2
  $region1: #{tpu_custom_call.1} parent=0
    #allocation2 [shape = 'u8[4096]{0}', space=vmem, size = 0x1000, scoped, tag = 'input window, operand 0, single buffered']
    #allocation3 [shape = 's32[1]{0}', space=sflag, size = 0x4, scoped, tag = 'scoped memory for tpu_custom_call.1']
    #allocation4 [shape = 's32[1]{0}', space=sflag, size = 0x4, scoped, tag = 'scoped memory for tpu_custom_call.1']
    #allocation5 [shape = 'u8[12288]{0}', space=vmem, size = 0x3000, scoped, tag = 'output window, operand 0, single buffered']
    %6 = vsyncpa [#allocation3], 0
    %7 = vsyncpa [#allocation4], 0
    // Predicated region
    $region2: #{tpu_custom_call.1} parent=1 // pred_check
      _
    $region3: #{tpu_custom_call.1} parent=1 // pred_check_branch
      %9 = sbr.rel (0) target = $region5
    $region4: #{tpu_custom_call.1} parent=1 // pred_region
      %s11 = ssub.s32 128, 128
      %12 = vsyncadd [#allocation3], %s11
      %s14 = sshll.u32 [#allocation2], 4
      %s15 = int_to_ptr.vmem [resolvable:$true] %s14
      %17 = dma.hbm_to_vmem [thread:$0]  %s0, 128, %s15, [#allocation3]
    $region5: #{tpu_custom_call.1} parent=1 // pred_fallthru
      _
    // Predicated region
    $region6: #{tpu_custom_call.1} parent=1 // pred_check
      _
    $region7: #{tpu_custom_call.1} parent=1 // pred_check_branch
      %19 = sbr.rel (0) target = $region9
    $region8: #{tpu_custom_call.1} parent=1 // pred_region
      %20 = dma.done [#allocation3], 128
    $region9: #{tpu_custom_call.1} parent=1 // pred_fallthru
      _
    %v21 = vld [vmem:[#allocation2] sm:$0xff]
    %v22 = vmul.f32 %v21, %v21
    %v23 = vmul.f32 %v22, -1792.8215
    %v24 = vmul.f32 %v23, 1.442695
    %v25 = vpow.pop %v24
    %v26 = vrot.slane %v25, 4
    %v27 = vadd.f32 %v25, %v26
    %v28 = vrot.slane %v27, 2
    %v29 = vadd.f32 %v27, %v28
    %v30 = vrot.slane %v29, 1
    %v31 = vadd.f32 %v29, %v30
    %v32 = vsub.f32 %v21, 0.05
    %v33 = vmul.f32 %v32, %v32
    %v34 = vmul.f32 %v33, -1792.8215
    %v35 = vmul.f32 %v34, 1.442695
    %v36 = vpow.pop %v35
    %v37 = vrot.slane %v36, 4
    %v38 = vadd.f32 %v36, %v37
    %v39 = vrot.slane %v38, 2
    %v40 = vadd.f32 %v38, %v39
    %v41 = vrot.slane %v40, 1
    %v42 = vadd.f32 %v40, %v41
    %v43 = vsub.f32 %v21, 0.1
    %v44 = vmul.f32 %v43, %v43
    %v45 = vmul.f32 %v44, -1792.8215
    %v46 = vmul.f32 %v45, 1.442695
    %v47 = vpow.pop %v46
    %v48 = vrot.slane %v47, 4
    %v49 = vadd.f32 %v47, %v48
    %v50 = vrot.slane %v49, 2
    %v51 = vadd.f32 %v49, %v50
    %v52 = vrot.slane %v51, 1
    %v53 = vadd.f32 %v51, %v52
    %v54 = vsub.f32 %v21, 0.15
    %v55 = vmul.f32 %v54, %v54
    %v56 = vmul.f32 %v55, -1792.8215
    %v57 = vmul.f32 %v56, 1.442695
    %v58 = vpow.pop %v57
    %v59 = vrot.slane %v58, 4
    %v60 = vadd.f32 %v58, %v59
    %v61 = vrot.slane %v60, 2
    %v62 = vadd.f32 %v60, %v61
    %v63 = vrot.slane %v62, 1
    %v64 = vadd.f32 %v62, %v63
    %v65 = vsub.f32 %v21, 0.2
    %v66 = vmul.f32 %v65, %v65
    %v67 = vmul.f32 %v66, -1792.8215
    %v68 = vmul.f32 %v67, 1.442695
    %v69 = vpow.pop %v68
    %v70 = vrot.slane %v69, 4
    %v71 = vadd.f32 %v69, %v70
    %v72 = vrot.slane %v71, 2
    %v73 = vadd.f32 %v71, %v72
    %v74 = vrot.slane %v73, 1
    %v75 = vadd.f32 %v73, %v74
    %v76 = vsub.f32 %v21, 0.25
    %v77 = vmul.f32 %v76, %v76
    %v78 = vmul.f32 %v77, -1792.8215
    %v79 = vmul.f32 %v78, 1.442695
    %v80 = vpow.pop %v79
    %v81 = vrot.slane %v80, 4
    %v82 = vadd.f32 %v80, %v81
    %v83 = vrot.slane %v82, 2
    %v84 = vadd.f32 %v82, %v83
    %v85 = vrot.slane %v84, 1
    %v86 = vadd.f32 %v84, %v85
    %v87 = vsub.f32 %v21, 0.3
    %v88 = vmul.f32 %v87, %v87
    %v89 = vmul.f32 %v88, -1792.8215
    %v90 = vmul.f32 %v89, 1.442695
    %v91 = vpow.pop %v90
    %v92 = vrot.slane %v91, 4
    %v93 = vadd.f32 %v91, %v92
    %v94 = vrot.slane %v93, 2
    %v95 = vadd.f32 %v93, %v94
    %v96 = vrot.slane %v95, 1
    %v97 = vadd.f32 %v95, %v96
    %v98 = vsub.f32 %v21, 0.35
    %v99 = vmul.f32 %v98, %v98
    %v100 = vmul.f32 %v99, -1792.8215
    %v101 = vmul.f32 %v100, 1.442695
    %v102 = vpow.pop %v101
    %v103 = vrot.slane %v102, 4
    %v104 = vadd.f32 %v102, %v103
    %v105 = vrot.slane %v104, 2
    %v106 = vadd.f32 %v104, %v105
    %v107 = vrot.slane %v106, 1
    %v108 = vadd.f32 %v106, %v107
    %v109 = vsub.f32 %v21, 0.4
    %v110 = vmul.f32 %v109, %v109
    %v111 = vmul.f32 %v110, -1792.8215
    %v112 = vmul.f32 %v111, 1.442695
    %v113 = vpow.pop %v112
    %v114 = vrot.slane %v113, 4
    %v115 = vadd.f32 %v113, %v114
    %v116 = vrot.slane %v115, 2
    %v117 = vadd.f32 %v115, %v116
    %v118 = vrot.slane %v117, 1
    %v119 = vadd.f32 %v117, %v118
    %v120 = vsub.f32 %v21, 0.45
    %v121 = vmul.f32 %v120, %v120
    %v122 = vmul.f32 %v121, -1792.8215
    %v123 = vmul.f32 %v122, 1.442695
    %v124 = vpow.pop %v123
    %v125 = vrot.slane %v124, 4
    %v126 = vadd.f32 %v124, %v125
    %v127 = vrot.slane %v126, 2
    %v128 = vadd.f32 %v126, %v127
    %v129 = vrot.slane %v128, 1
    %v130 = vadd.f32 %v128, %v129
    %v131 = vsub.f32 %v21, 0.5
    %v132 = vmul.f32 %v131, %v131
    %v133 = vmul.f32 %v132, -1792.8215
    %v134 = vmul.f32 %v133, 1.442695
    %v135 = vpow.pop %v134
    %v136 = vrot.slane %v135, 4
    %v137 = vadd.f32 %v135, %v136
    %v138 = vrot.slane %v137, 2
    %v139 = vadd.f32 %v137, %v138
    %v140 = vrot.slane %v139, 1
    %v141 = vadd.f32 %v139, %v140
    %v142 = vsub.f32 %v21, 0.55
    %v143 = vmul.f32 %v142, %v142
    %v144 = vmul.f32 %v143, -1792.8215
    %v145 = vmul.f32 %v144, 1.442695
    %v146 = vpow.pop %v145
    %v147 = vrot.slane %v146, 4
    %v148 = vadd.f32 %v146, %v147
    %v149 = vrot.slane %v148, 2
    %v150 = vadd.f32 %v148, %v149
    %v151 = vrot.slane %v150, 1
    %v152 = vadd.f32 %v150, %v151
    %v153 = vsub.f32 %v21, 0.6
    %v154 = vmul.f32 %v153, %v153
    %v155 = vmul.f32 %v154, -1792.8215
    %v156 = vmul.f32 %v155, 1.442695
    %v157 = vpow.pop %v156
    %v158 = vrot.slane %v157, 4
    %v159 = vadd.f32 %v157, %v158
    %v160 = vrot.slane %v159, 2
    %v161 = vadd.f32 %v159, %v160
    %v162 = vrot.slane %v161, 1
    %v163 = vadd.f32 %v161, %v162
    %v164 = vsub.f32 %v21, 0.65
    %v165 = vmul.f32 %v164, %v164
    %v166 = vmul.f32 %v165, -1792.8215
    %v167 = vmul.f32 %v166, 1.442695
    %v168 = vpow.pop %v167
    %v169 = vrot.slane %v168, 4
    %v170 = vadd.f32 %v168, %v169
    %v171 = vrot.slane %v170, 2
    %v172 = vadd.f32 %v170, %v171
    %v173 = vrot.slane %v172, 1
    %v174 = vadd.f32 %v172, %v173
    %v175 = vsub.f32 %v21, 0.7
    %v176 = vmul.f32 %v175, %v175
    %v177 = vmul.f32 %v176, -1792.8215
    %v178 = vmul.f32 %v177, 1.442695
    %v179 = vpow.pop %v178
    %v180 = vrot.slane %v179, 4
    %v181 = vadd.f32 %v179, %v180
    %v182 = vrot.slane %v181, 2
    %v183 = vadd.f32 %v181, %v182
    %v184 = vrot.slane %v183, 1
    %v185 = vadd.f32 %v183, %v184
    %v186 = vsub.f32 %v21, 0.75
    %v187 = vmul.f32 %v186, %v186
    %v188 = vmul.f32 %v187, -1792.8215
    %v189 = vmul.f32 %v188, 1.442695
    %v190 = vpow.pop %v189
    %v191 = vrot.slane %v190, 4
    %v192 = vadd.f32 %v190, %v191
    %v193 = vrot.slane %v192, 2
    %v194 = vadd.f32 %v192, %v193
    %v195 = vrot.slane %v194, 1
    %v196 = vadd.f32 %v194, %v195
    %v197 = vsub.f32 %v21, 0.8
    %v198 = vmul.f32 %v197, %v197
    %v199 = vmul.f32 %v198, -1792.8215
    %v200 = vmul.f32 %v199, 1.442695
    %v201 = vpow.pop %v200
    %v202 = vrot.slane %v201, 4
    %v203 = vadd.f32 %v201, %v202
    %v204 = vrot.slane %v203, 2
    %v205 = vadd.f32 %v203, %v204
    %v206 = vrot.slane %v205, 1
    %v207 = vadd.f32 %v205, %v206
    %v208 = vsub.f32 %v21, 0.85
    %v209 = vmul.f32 %v208, %v208
    %v210 = vmul.f32 %v209, -1792.8215
    %v211 = vmul.f32 %v210, 1.442695
    %v212 = vpow.pop %v211
    %v213 = vrot.slane %v212, 4
    %v214 = vadd.f32 %v212, %v213
    %v215 = vrot.slane %v214, 2
    %v216 = vadd.f32 %v214, %v215
    %v217 = vrot.slane %v216, 1
    %v218 = vadd.f32 %v216, %v217
    %v219 = vsub.f32 %v21, 0.9
    %v220 = vmul.f32 %v219, %v219
    %v221 = vmul.f32 %v220, -1792.8215
    %v222 = vmul.f32 %v221, 1.442695
    %v223 = vpow.pop %v222
    %v224 = vrot.slane %v223, 4
    %v225 = vadd.f32 %v223, %v224
    %v226 = vrot.slane %v225, 2
    %v227 = vadd.f32 %v225, %v226
    %v228 = vrot.slane %v227, 1
    %v229 = vadd.f32 %v227, %v228
    %v230 = vsub.f32 %v21, 0.95
    %v231 = vmul.f32 %v230, %v230
    %v232 = vmul.f32 %v231, -1792.8215
    %v233 = vmul.f32 %v232, 1.442695
    %v234 = vpow.pop %v233
    %v235 = vrot.slane %v234, 4
    %v236 = vadd.f32 %v234, %v235
    %v237 = vrot.slane %v236, 2
    %v238 = vadd.f32 %v236, %v237
    %v239 = vrot.slane %v238, 1
    %v240 = vadd.f32 %v238, %v239
    %v241 = vsub.f32 %v21, 1.0
    %v242 = vmul.f32 %v241, %v241
    %v243 = vmul.f32 %v242, -1792.8215
    %v244 = vmul.f32 %v243, 1.442695
    %v245 = vpow.pop %v244
    %v246 = vrot.slane %v245, 4
    %v247 = vadd.f32 %v245, %v246
    %v248 = vrot.slane %v247, 2
    %v249 = vadd.f32 %v247, %v248
    %v250 = vrot.slane %v249, 1
    %v251 = vadd.f32 %v249, %v250
    %vm252 = vcmask 1040384
    %v253 = vsel %vm252, %v31, %v42
    %vm254 = vcmask 1041408
    %v255 = vsel %vm254, %v253, %v53
    %vm256 = vcmask 1042432
    %v257 = vsel %vm256, %v255, %v64
    %vm258 = vcmask 1043456
    %v259 = vsel %vm258, %v257, %v75
    %vm260 = vcmask 1044480
    %v261 = vsel %vm260, %v259, %v86
    %vm262 = vcmask 1045504
    %v263 = vsel %vm262, %v261, %v97
    %vm264 = vcmask 1046528
    %v265 = vsel %vm264, %v263, %v108
    %v266 = vsel %vm252, %v119, %v130
    %v267 = vsel %vm254, %v266, %v141
    %v268 = vsel %vm256, %v267, %v152
    %v269 = vsel %vm258, %v268, %v163
    %v270 = vsel %vm260, %v269, %v174
    %v271 = vsel %vm262, %v270, %v185
    %v272 = vsel %vm264, %v271, %v196
    %v273 = vsel %vm252, %v207, %v218
    %v274 = vsel %vm254, %v273, %v229
    %v275 = vsel %vm256, %v274, %v240
    %v276 = vsel %vm258, %v275, %v251
    %p277 = scmp.eq.s32.totalorder 0, 0
    // Predicated region
    $region10: #{tpu_custom_call.1} parent=1 // pred_check
      %p278 = pneg %p277
    $region11: #{tpu_custom_call.1} parent=1 // pred_check_branch
      %280 = sbr.rel (%p278) target = $region13
    $region12: #{tpu_custom_call.1} parent=1 // pred_region
      %281 = vst [vmem:[#allocation5] sm:$0xff] 0.0
      %282 = vst [vmem:[#allocation5 + $0x8] sm:$0xff] 0.0
      %283 = vst [vmem:[#allocation5 + $0x10] sm:$0x1f] 0.0
    $region13: #{tpu_custom_call.1} parent=1 // pred_fallthru
      _
    %v284 = vld [vmem:[#allocation5] sm:$0xff]
    %v285 = vld [vmem:[#allocation5 + $0x8] sm:$0xff]
    %v286 = vld [vmem:[#allocation5 + $0x10] sm:$0x1f]
    %v287 = vadd.f32 %v284, %v265
    %v288 = vadd.f32 %v285, %v272
    %v289 = vadd.f32 %v286, %v276
    %290 = vst [vmem:[#allocation5] sm:$0xff] %v287
    %291 = vst [vmem:[#allocation5 + $0x8] sm:$0xff] %v288
    %292 = vst [vmem:[#allocation5 + $0x10] sm:$0x1f] %v289
    // Predicated region
    $region14: #{tpu_custom_call.1} parent=1 // pred_check
      %p293 = pneg %p277
    $region15: #{tpu_custom_call.1} parent=1 // pred_check_branch
      %295 = sbr.rel (%p293) target = $region17
    $region16: #{tpu_custom_call.1} parent=1 // pred_region
      %v296 = vld [vmem:[#allocation5] sm:$0xff]
      %v297 = vld [vmem:[#allocation5 + $0x8] sm:$0xff]
      %v298 = vld [vmem:[#allocation5 + $0x10] sm:$0x1f]
      %v299 = vadd.f32 %v296, %v297
      %v300 = vsel %vm260, %v298, 0.0
      %v301 = vadd.f32 %v299, %v300
      %v302 = vrot.slane %v301, 4
      %v303 = vadd.f32 %v301, %v302
      %v304 = vrot.slane %v303, 2
      %v305 = vadd.f32 %v303, %v304
      %v306 = vrot.slane %v305, 1
      %v307 = vadd.f32 %v305, %v306
      %v308 = vrcp.pop %v307
      %v309 = vmul.f32 %v296, %v308
      %v310 = vmul.f32 %v297, %v308
      %v311 = vmul.f32 %v298, %v308
      %312 = vst [vmem:[#allocation5] sm:$0xff] %v309
      %313 = vst [vmem:[#allocation5 + $0x8] sm:$0xff] %v310
      %314 = vst [vmem:[#allocation5 + $0x10] sm:$0x1f] %v311
    $region17: #{tpu_custom_call.1} parent=1 // pred_fallthru
      _
    // Predicated region
    $region18: #{tpu_custom_call.1} parent=1 // pred_check
      _
    $region19: #{tpu_custom_call.1} parent=1 // pred_check_branch
      %316 = sbr.rel (0) target = $region21
    $region20: #{tpu_custom_call.1} parent=1 // pred_region
      %s318 = ssub.s32 384, 384
      %319 = vsyncadd [#allocation4], %s318
      %s320 = sshll.u32 [#allocation5], 4
      %s321 = int_to_ptr.vmem [resolvable:$true] %s320
      %326 = dma.vmem_to_hbm [thread:$0]  %s321, 384, %s1, [#allocation4], 128, 128, 8
    $region21: #{tpu_custom_call.1} parent=1 // pred_fallthru
      _
    // Predicated region
    $region22: #{tpu_custom_call.1} parent=1 // pred_check
      _
    $region23: #{tpu_custom_call.1} parent=1 // pred_check_branch
      %328 = sbr.rel (0) target = $region25
    $region24: #{tpu_custom_call.1} parent=1 // pred_region
      %329 = dma.done [#allocation4], 384
    $region25: #{tpu_custom_call.1} parent=1 // pred_fallthru
      _
    %330 = vsyncpa [#allocation3], 1
    %331 = vsyncpa [#allocation4], 1

</llo_original>
